<compile_context>
chip_gen: v7x
topology: tpu7x:2x2x1
jax: 0.10.0
libtpu: 0.0.40
codegen_flags: <defaults>
</compile_context>

<pallas_src>
import functools

import jax
import jax.numpy as jnp
from jax.experimental import pallas as pl
from jax.experimental.pallas import tpu as pltpu


def _round_up(x, m):
    return ((x + m - 1) // m) * m


def make_jacobi_recurrence_coeffs(order, alpha, beta):
    """Replicates CustomJacobiLayer.set_k()."""
    k1 = [0.0] * (order + 1)
    k2 = [0.0] * (order + 1)
    k3 = [0.0] * (order + 1)
    a, b = float(alpha), float(beta)
    for i in range(2, order + 1):
        k1[i] = (2 * i + a + b) * (2 * i + a + b - 1) / (2 * i * (i + a + b))
        k2[i] = (2 * i + a + b - 1) * (a * a - b * b) / (
            2 * i * (i + a + b) * (2 * i + a + b - 2))
        k3[i] = (i + a - 1) * (i + b - 1) * (2 * i + a + b) / (
            i * (i + a + b) * (2 * i + a + b - 2))
    return tuple(k1), tuple(k2), tuple(k3)


def jacobi_kernel(x_ref, coef_ref, out_ref, p_ref, *, order, alpha, beta,
                  k1, k2, k3, input_size, mxu_dtype):
    # x_ref:    (TB, I)            f32
    # coef_ref: ((K+1)*I, TO)      mxu_dtype, rows ordered k-major then i
    # out_ref:  (TB, TO)           f32
    # p_ref:    (TB, (K+1)*I)      f32 VMEM scratch holding all P_k slices
    I = input_size

    # The Jacobi basis only depends on the batch tile, not on the output tile.
    # Output axis is the inner "arbitrary" grid axis, so for each batch tile
    # the o == 0 step runs first on its core; the scratch then persists and is
    # reused for every subsequent output tile of that batch tile.
    @pl.when(pl.program_id(1) == 0)
    def _compute_basis():
        xt = jnp.tanh(x_ref[...])                            # (TB, I) f32 EUP/VPU

        # P_0(x) = 1
        p_prev2 = jnp.ones_like(xt)
        p_ref[:, 0:I] = p_prev2

        if order >= 1:
            # P_1(x) = 0.5*(a+b+2)*x - 0.5*(a-b)
            p_prev1 = 0.5 * (alpha + beta + 2.0) * xt - 0.5 * (alpha - beta)
            p_ref[:, I:2 * I] = p_prev1

            # P_i(x) = (k1[i]*x + k2[i]) * P_{i-1}(x) - k3[i] * P_{i-2}(x)
            # Only the last two P's stay live in vregs; the rest live in VMEM.
            # TODO(synk): for very large `order` (> ~16) switch this Python
            # unroll to lax.fori_loop over order-chunks to bound LLO code size.
            for i in range(2, order + 1):
                p = (k1[i] * xt + k2[i]) * p_prev1 - k3[i] * p_prev2
                p_ref[:, i * I:(i + 1) * I] = p
                p_prev2, p_prev1 = p_prev1, p

    # One fused MXU matmul: contraction dim (K+1)*I instead of K+1 tiny dots.
    out_ref[...] = jnp.dot(
        p_ref[...].astype(mxu_dtype), coef_ref[...],
        preferred_element_type=jnp.float32).astype(out_ref.dtype)


def prepare_coef(coef, *, order, mxu_dtype=jnp.float32):
    """One-time parameter prep (keep this OUT of the per-step forward).

    coef: (output_size, input_size, order+1) -> ((order+1)*input_size, O_pad)
    Row layout is k-major: coef2d[k*I + i, o] == coef[o, i, k], matching the
    P scratch layout in the kernel. O is padded to a multiple of 128 so the
    output stores and MXU result columns are lane-dense.
    """
    O, I, K1 = coef.shape
    assert K1 == order + 1
    coef2d = jnp.transpose(coef.astype(jnp.float32), (2, 1, 0))   # (K+1, I, O)
    coef2d = coef2d.reshape((order + 1) * I, O)
    O_pad = _round_up(max(O, 1), 128)
    if O_pad > O:
        coef2d = jnp.pad(coef2d, ((0, 0), (0, O_pad - O)))
    return coef2d.astype(mxu_dtype)


def _select_tiles(B, I, KI, O_pad, itemsize):
    """Pick (TB, TO) tiles that fit a conservative VMEM working budget."""
    budget = 40 * 2**20   # leave headroom below v7x's 64 MiB per-TC VMEM

    def vmem_bytes(TB, TO):
        return (2 * TB * I * 4            # x tiles (double-buffered)
                + 2 * KI * TO * itemsize  # coef tiles (double-buffered)
                + 2 * TB * TO * 4         # out tiles (double-buffered)
                + TB * KI * 4)            # P scratch

    if B < 128:
        tb_cands = [_round_up(max(B, 1), 8)]
    else:
        tb_cands = [c for c in (512, 256, 128)
                    if B >= c and _round_up(B, c) <= 2 * B] or [128]
    to_cands = [t for t in (512, 256, 128) if O_pad % t == 0]

    for TB in tb_cands:
        for TO in to_cands:
            v = vmem_bytes(TB, TO)
            if v <= budget:
                return TB, TO, v
    TB, TO = tb_cands[-1], 128
    return TB, TO, vmem_bytes(TB, TO)


def custom_jacobi_forward(x, coef2d, *, order, alpha, beta, output_size,
                          input_size, mxu_dtype=jnp.float32):
    """x: (B, input_size) ; coef2d: output of prepare_coef."""
    B = x.shape[0]
    I = input_size
    KI, O_pad = coef2d.shape
    assert KI == (order + 1) * I
    assert O_pad % 128 == 0 and output_size <= O_pad

    itemsize = jnp.dtype(mxu_dtype).itemsize
    TB, TO, vmem_bytes = _select_tiles(B, I, KI, O_pad, itemsize)
    B_pad = _round_up(B, TB)

    k1, k2, k3 = make_jacobi_recurrence_coeffs(order, alpha, beta)

    x_p = x.astype(jnp.float32)
    if B_pad > B:
        x_p = jnp.pad(x_p, ((0, B_pad - B), (0, 0)))   # tanh(0)=0, rows sliced off

    kernel = functools.partial(
        jacobi_kernel,
        order=order, alpha=float(alpha), beta=float(beta),
        k1=k1, k2=k2, k3=k3, input_size=I, mxu_dtype=mxu_dtype)

    vmem_limit = int(min(64 * 2**20, max(int(1.5 * vmem_bytes), 16 * 2**20)))

    grid = (B_pad // TB, O_pad // TO)

    cost = pl.CostEstimate(
        flops=int(2 * B_pad * KI * O_pad + 8 * B_pad * I * (order + 1)),
        transcendentals=int(B_pad * I),
        bytes_accessed=int(B_pad * I * 4 + KI * O_pad * itemsize
                           + B_pad * O_pad * 4),
    )

    out = pl.pallas_call(
        kernel,
        out_shape=jax.ShapeDtypeStruct((B_pad, O_pad), jnp.float32),
        grid_spec=pltpu.PrefetchScalarGridSpec(
            num_scalar_prefetch=0,
            grid=grid,
            in_specs=[
                pl.BlockSpec((TB, I), lambda b, o: (b, 0)),
                pl.BlockSpec((KI, TO), lambda b, o: (0, o)),
            ],
            out_specs=pl.BlockSpec((TB, TO), lambda b, o: (b, o)),
            scratch_shapes=[pltpu.VMEM((TB, KI), jnp.float32)],
        ),
        compiler_params=pltpu.CompilerParams(
            # Batch axis sharded across cores (v7x megacore); output axis must
            # be sequential so the pl.when(o == 0) basis compute is reused.
            dimension_semantics=("parallel", "arbitrary"),
            vmem_limit_bytes=vmem_limit,
        ),
        cost_estimate=cost,
    )(x_p, coef2d)

    return out[:B, :output_size]


def reference_forward(x, coef, *, order, alpha, beta):
    """Pure-JAX mirror of the PyTorch forward, for verification."""
    k1, k2, k3 = make_jacobi_recurrence_coeffs(order, alpha, beta)
    xt = jnp.tanh(x.astype(jnp.float32))
    jv = [jnp.ones_like(xt)]
    if order >= 1:
        jv.append(0.5 * (alpha + beta + 2.0) * xt - 0.5 * (alpha - beta))
    for i in range(2, order + 1):
        jv.append((k1[i] * xt + k2[i]) * jv[-1] - k3[i] * jv[-2])
    jv = jnp.stack(jv, axis=-1)                     # (B, I, K+1)
    return jnp.einsum("bik,oik->bo", jv, coef.astype(jnp.float32))


def _run_case(key, batch, input_size, output_size, order, alpha, beta):
    kx, kc = jax.random.split(key)
    x = jax.random.normal(kx, (batch, input_size), dtype=jnp.float32)
    # nn.Parameter(torch.randn(output_size, input_size, order+1) * 0.1)
    coef = jax.random.normal(
        kc, (output_size, input_size, order + 1), dtype=jnp.float32) * 0.1

    ref = reference_forward(x, coef, order=order, alpha=alpha, beta=beta)

    # --- f32 MXU path (exact; v5e-friendly) ---------------------------------
    coef2d_f32 = prepare_coef(coef, order=order, mxu_dtype=jnp.float32)
    out = custom_jacobi_forward(
        x, coef2d_f32, order=order, alpha=alpha, beta=beta,
        output_size=output_size, input_size=input_size,
        mxu_dtype=jnp.float32)
    out = jax.block_until_ready(out)
    assert out.shape == (batch, output_size)
    assert jnp.allclose(out, ref, atol=1e-4, rtol=1e-4), (
        f"f32 max abs err {jnp.max(jnp.abs(out - ref))}")

    # --- bf16 MXU-operand path (v6e/v7x fast path; recursion stays f32) -----
    coef2d_bf16 = prepare_coef(coef, order=order, mxu_dtype=jnp.bfloat16)
    out_bf16 = custom_jacobi_forward(
        x, coef2d_bf16, order=order, alpha=alpha, beta=beta,
        output_size=output_size, input_size=input_size,
        mxu_dtype=jnp.bfloat16)
    out_bf16 = jax.block_until_ready(out_bf16)
    assert out_bf16.shape == (batch, output_size)
    assert jnp.allclose(out_bf16, ref, atol=7e-2, rtol=5e-2), (
        f"bf16 max abs err {jnp.max(jnp.abs(out_bf16 - ref))}")


if __name__ == "__main__":
    key = jax.random.PRNGKey(0)
    k0, k1 = jax.random.split(key)

    # Case 1: the module's natural small shape.
    _run_case(k0, batch=8, input_size=32, output_size=16,
              order=4, alpha=1.0, beta=1.0)

    # Case 2: exercises batch padding, >1 output tile (basis reuse across the
    # "arbitrary" output axis), and non-(8,128)-multiple input_size.
    _run_case(k1, batch=40, input_size=24, output_size=300,
              order=5, alpha=0.5, beta=1.5)

    print("KERNEL_OK")
</pallas_src>

<mosaic_0001>
module attributes {stable_mosaic.version = 11 : i64} {
  func.func @jacobi_kernel(%arg0: i32, %arg1: i32, %arg2: memref<8x32xf32, #tpu.memory_space<vmem>>, %arg3: memref<160x128xf32, #tpu.memory_space<vmem>>, %arg4: memref<8x128xf32, #tpu.memory_space<vmem>>, %arg5: memref<8x160xf32, #tpu.memory_space<vmem>>) attributes {dimension_semantics = [#tpu.dimension_semantics<parallel>, #tpu.dimension_semantics<arbitrary>], iteration_bounds = array<i64: 1, 1>, scalar_prefetch = 0 : i64, scratch_operands = 1 : i64, tpu.core_type = #tpu.core_type<tc>, window_params = [{transform_indices = @transform_0, window_bounds = array<i64: 8, 32>}, {transform_indices = @transform_1, window_bounds = array<i64: 160, 128>}, {transform_indices = @transform_2, window_bounds = array<i64: 8, 128>}]} {
    %c0_i32 = arith.constant 0 : i32
    %0 = arith.cmpi eq, %arg1, %c0_i32 : i32
    %1 = arith.extui %0 : i1 to i32
    %c0_i32_0 = arith.constant 0 : i32
    %2 = arith.cmpi ne, %1, %c0_i32_0 : i32
    scf.if %2 {
      %c0_6 = arith.constant 0 : index
      %c0_7 = arith.constant 0 : index
      %7 = vector.load %arg2[%c0_6, %c0_7] : memref<8x32xf32, #tpu.memory_space<vmem>>, vector<8x32xf32>
      %8 = math.tanh %7 : vector<8x32xf32>
      %cst_8 = arith.constant 1.000000e+00 : f32
      %9 = vector.broadcast %cst_8 : f32 to vector<8x32xf32>
      %c0_9 = arith.constant 0 : index
      %c0_10 = arith.constant 0 : index
      %10 = vector.load %arg5[%c0_9, %c0_10] : memref<8x160xf32, #tpu.memory_space<vmem>>, vector<8x32xf32>
      tpu.vector_store %arg5[%c0_9, %c0_10], %9 {strides = array<i32>} : memref<8x160xf32, #tpu.memory_space<vmem>>, vector<8x32xf32>,
      %cst_11 = arith.constant 2.000000e+00 : f32
      %11 = vector.broadcast %cst_11 : f32 to vector<8x32xf32>
      %12 = arith.mulf %11, %8 : vector<8x32xf32>
      %cst_12 = arith.constant 0.000000e+00 : f32
      %13 = vector.broadcast %cst_12 : f32 to vector<8x32xf32>
      %14 = arith.subf %12, %13 : vector<8x32xf32>
      %c0_13 = arith.constant 0 : index
      %c32 = arith.constant 32 : index
      %15 = vector.load %arg5[%c0_13, %c32] : memref<8x160xf32, #tpu.memory_space<vmem>>, vector<8x32xf32>
      tpu.vector_store %arg5[%c0_13, %c32], %14 {strides = array<i32>} : memref<8x160xf32, #tpu.memory_space<vmem>>, vector<8x32xf32>,
      %cst_14 = arith.constant 1.875000e+00 : f32
      %16 = vector.broadcast %cst_14 : f32 to vector<8x32xf32>
      %17 = arith.mulf %16, %8 : vector<8x32xf32>
      %cst_15 = arith.constant 0.000000e+00 : f32
      %18 = vector.broadcast %cst_15 : f32 to vector<8x32xf32>
      %19 = arith.addf %17, %18 : vector<8x32xf32>
      %20 = arith.mulf %19, %14 : vector<8x32xf32>
      %cst_16 = arith.constant 7.500000e-01 : f32
      %21 = vector.broadcast %cst_16 : f32 to vector<8x32xf32>
      %22 = arith.mulf %21, %9 : vector<8x32xf32>
      %23 = arith.subf %20, %22 : vector<8x32xf32>
      %c0_17 = arith.constant 0 : index
      %c64 = arith.constant 64 : index
      %24 = vector.load %arg5[%c0_17, %c64] : memref<8x160xf32, #tpu.memory_space<vmem>>, vector<8x32xf32>
      tpu.vector_store %arg5[%c0_17, %c64], %23 {strides = array<i32>} : memref<8x160xf32, #tpu.memory_space<vmem>>, vector<8x32xf32>,
      %cst_18 = arith.constant 1.86666667 : f32
      %25 = vector.broadcast %cst_18 : f32 to vector<8x32xf32>
      %26 = arith.mulf %25, %8 : vector<8x32xf32>
      %cst_19 = arith.constant 0.000000e+00 : f32
      %27 = vector.broadcast %cst_19 : f32 to vector<8x32xf32>
      %28 = arith.addf %26, %27 : vector<8x32xf32>
      %29 = arith.mulf %28, %23 : vector<8x32xf32>
      %cst_20 = arith.constant 8.000000e-01 : f32
      %30 = vector.broadcast %cst_20 : f32 to vector<8x32xf32>
      %31 = arith.mulf %30, %14 : vector<8x32xf32>
      %32 = arith.subf %29, %31 : vector<8x32xf32>
      %c0_21 = arith.constant 0 : index
      %c96 = arith.constant 96 : index
      %33 = vector.load %arg5[%c0_21, %c96] : memref<8x160xf32, #tpu.memory_space<vmem>>, vector<8x32xf32>
      tpu.vector_store %arg5[%c0_21, %c96], %32 {strides = array<i32>} : memref<8x160xf32, #tpu.memory_space<vmem>>, vector<8x32xf32>,
      %cst_22 = arith.constant 1.875000e+00 : f32
      %34 = vector.broadcast %cst_22 : f32 to vector<8x32xf32>
      %35 = arith.mulf %34, %8 : vector<8x32xf32>
      %cst_23 = arith.constant 0.000000e+00 : f32
      %36 = vector.broadcast %cst_23 : f32 to vector<8x32xf32>
      %37 = arith.addf %35, %36 : vector<8x32xf32>
      %38 = arith.mulf %37, %32 : vector<8x32xf32>
      %cst_24 = arith.constant 0.833333313 : f32
      %39 = vector.broadcast %cst_24 : f32 to vector<8x32xf32>
      %40 = arith.mulf %39, %23 : vector<8x32xf32>
      %41 = arith.subf %38, %40 : vector<8x32xf32>
      %c0_25 = arith.constant 0 : index
      %c128 = arith.constant 128 : index
      %42 = vector.load %arg5[%c0_25, %c128] : memref<8x160xf32, #tpu.memory_space<vmem>>, vector<8x32xf32>
      tpu.vector_store %arg5[%c0_25, %c128], %41 {strides = array<i32>} : memref<8x160xf32, #tpu.memory_space<vmem>>, vector<8x32xf32>,
    } else {
    }
    %c0 = arith.constant 0 : index
    %c0_1 = arith.constant 0 : index
    %3 = vector.load %arg5[%c0, %c0_1] : memref<8x160xf32, #tpu.memory_space<vmem>>, vector<8x160xf32>
    %c0_2 = arith.constant 0 : index
    %c0_3 = arith.constant 0 : index
    %4 = vector.load %arg3[%c0_2, %c0_3] : memref<160x128xf32, #tpu.memory_space<vmem>>, vector<160x128xf32>
    %cst = arith.constant dense<0.000000e+00> : vector<8x128xf32>
    %5 = tpu.matmul %3, %4, %cst {dimension_numbers = #tpu.dot_dimension_numbers<[1], [0], [0], [1], [0, 0, 1, 1], [], []>} : vector<8x160xf32>, vector<160x128xf32>, vector<8x128xf32> -> vector<8x128xf32>
    %c0_4 = arith.constant 0 : index
    %c0_5 = arith.constant 0 : index
    %6 = vector.load %arg4[%c0_4, %c0_5] : memref<8x128xf32, #tpu.memory_space<vmem>>, vector<8x128xf32>
    tpu.vector_store %arg4[%c0_4, %c0_5], %5 {strides = array<i32>} : memref<8x128xf32, #tpu.memory_space<vmem>>, vector<8x128xf32>,
    return
  }
  func.func @transform_0(%arg0: i32, %arg1: i32) -> (i32, i32) {
    %c0_i32 = arith.constant 0 : i32
    %c0_i32_0 = arith.constant 0 : i32
    return %arg0, %c0_i32 : i32, i32
  }
  func.func @transform_1(%arg0: i32, %arg1: i32) -> (i32, i32) {
    %c0_i32 = arith.constant 0 : i32
    %c0_i32_0 = arith.constant 0 : i32
    return %c0_i32, %arg1 : i32, i32
  }
  func.func @transform_2(%arg0: i32, %arg1: i32) -> (i32, i32) {
    %c0_i32 = arith.constant 0 : i32
    return %arg0, %arg1 : i32, i32
  }
}

</mosaic_0001>

<llo_original>
// kernel: tpu_custom_call.1
$region0: #{tpu_custom_call.1}
  #allocation0 [shape = 'u32[]', space=smem, size = 0x4, offset = 0x4, fixed_abs, tag = 'smem constant byte address 0x4 - core index']
  #allocation1 [shape = 'u32[144,128]{1,0:T(1,128)}', space=vmem, size = 0x12000, scoped, tag = 'internal scratch']
  #allocation2 [shape = 'f32[8,160]{1,0:T(8,128)}', space=vmem, size = 0x2000, scoped, tag = 'scratch operand']
  %s0 = inlined_call_operand.hbm [shape: f32[8,32], index: 0, kind: input, shape index: {}]
  %s1 = inlined_call_operand.hbm [shape: f32[160,128], index: 1, kind: input, shape index: {}]
  %s2 = inlined_call_operand.hbm [shape: f32[8,128], index: 2, kind: output, shape index: {}]
  %s3 = sld [smem:[#allocation0]]
  $region30: #{tpu_custom_call.1} parent=0
    _
  %s5 = ssub.s32 1, %s3
  %s6 = scalar_select 0, %s5, %s3
  $region1: #{tpu_custom_call.1} parent=0
    #allocation3 [shape = 'u8[4096]{0}', space=vmem, size = 0x1000, scoped, tag = 'input window, operand 0, single buffered']
    #allocation4 [shape = 's32[1]{0}', space=sflag, size = 0x4, scoped, tag = 'scoped memory for tpu_custom_call.1']
    #allocation5 [shape = 's32[1]{0}', space=sflag, size = 0x4, scoped, tag = 'scoped memory for tpu_custom_call.1']
    #allocation6 [shape = 'u8[81920]{0}', space=vmem, size = 0x14000, scoped, tag = 'input window, operand 1, single buffered']
    #allocation7 [shape = 's32[1]{0}', space=sflag, size = 0x4, scoped, tag = 'scoped memory for tpu_custom_call.1']
    #allocation8 [shape = 'u8[4096]{0}', space=vmem, size = 0x1000, scoped, tag = 'output window, operand 0, single buffered']
    %7 = vsyncpa [#allocation4], 0
    %8 = vsyncpa [#allocation7], 0
    %9 = vsyncpa [#allocation5], 0
    // Predicated region
    $region2: #{tpu_custom_call.1} parent=1 // pred_check
      _
    $region3: #{tpu_custom_call.1} parent=1 // pred_check_branch
      %11 = sbr.rel (0) target = $region5
    $region4: #{tpu_custom_call.1} parent=1 // pred_region
      %s13 = ssub.s32 128, 128
      %14 = vsyncadd [#allocation4], %s13
      %s16 = sshll.u32 [#allocation3], 4
      %s17 = int_to_ptr.vmem [resolvable:$true] %s16
      %19 = dma.hbm_to_vmem [thread:$0]  %s0, 128, %s17, [#allocation4]
    $region5: #{tpu_custom_call.1} parent=1 // pred_fallthru
      _
    // Predicated region
    $region6: #{tpu_custom_call.1} parent=1 // pred_check
      _
    $region7: #{tpu_custom_call.1} parent=1 // pred_check_branch
      %21 = sbr.rel (0) target = $region9
    $region8: #{tpu_custom_call.1} parent=1 // pred_region
      %s23 = ssub.s32 2560, 2560
      %24 = vsyncadd [#allocation7], %s23
      %s25 = sshll.u32 [#allocation6], 4
      %s26 = int_to_ptr.vmem [resolvable:$true] %s25
      %31 = dma.hbm_to_vmem [thread:$0]  %s1, 2560, %s26, [#allocation7], 128, 128, 8
    $region9: #{tpu_custom_call.1} parent=1 // pred_fallthru
      _
    // Predicated region
    $region10: #{tpu_custom_call.1} parent=1 // pred_check
      _
    $region11: #{tpu_custom_call.1} parent=1 // pred_check_branch
      %33 = sbr.rel (0) target = $region13
    $region12: #{tpu_custom_call.1} parent=1 // pred_region
      %34 = dma.done [#allocation4], 128
    $region13: #{tpu_custom_call.1} parent=1 // pred_fallthru
      _
    // Predicated region
    $region14: #{tpu_custom_call.1} parent=1 // pred_check
      _
    $region15: #{tpu_custom_call.1} parent=1 // pred_check_branch
      %36 = sbr.rel (0) target = $region17
    $region16: #{tpu_custom_call.1} parent=1 // pred_region
      %37 = dma.done [#allocation7], 2560
    $region17: #{tpu_custom_call.1} parent=1 // pred_fallthru
      _
    %p38 = scmp.eq.s32.totalorder 0, 0
    // Predicated region
    $region18: #{tpu_custom_call.1} parent=1 // pred_check
      %p39 = pneg %p38
    $region19: #{tpu_custom_call.1} parent=1 // pred_check_branch
      %41 = sbr.rel (%p39) target = $region21
    $region20: #{tpu_custom_call.1} parent=1 // pred_region
      %v42 = vld [vmem:[#allocation3] sm:$0xff]
      %v43 = vtanh.pop %v42
      %vm44 = vcmask 261120
      %45 = vst.msk [vmem:[#allocation2] sm:$0xff] %vm44, 1.0
      %v46 = vmul.f32 %v43, 2.0
      %48 = vrot.lane.b32.xlu0 %v46, 32
      %v49 = vpop.permute.xlu0 %48
      %vm51 = vcmask 523520
      %52 = vst.msk [vmem:[#allocation2] sm:$0xff] %vm51, %v49
      %v53 = vmul.f32 %v43, 1.875
      %v54 = vadd.f32 %v53, 0.0
      %v55 = vmul.f32 %v54, %v46
      %v56 = vsub.f32 %v55, 0.75
      %58 = vrot.lane.b32.xlu0 %v56, 64
      %v59 = vpop.permute.xlu0 %58
      %vm61 = vcmask 785920
      %62 = vst.msk [vmem:[#allocation2] sm:$0xff] %vm61, %v59
      %v63 = vmul.f32 %v43, 1.8666667
      %v64 = vadd.f32 %v63, 0.0
      %v65 = vmul.f32 %v64, %v56
      %v66 = vmul.f32 %v46, 0.8
      %v67 = vsub.f32 %v65, %v66
      %69 = vrot.lane.b32.xlu0 %v67, 96
      %v70 = vpop.permute.xlu0 %69
      %vm72 = vcmask 1048320
      %73 = vst.msk [vmem:[#allocation2] sm:$0xff] %vm72, %v70
      %v74 = vmul.f32 %v54, %v67
      %v75 = vmul.f32 %v56, 0.8333333
      %v76 = vsub.f32 %v74, %v75
      %77 = vst.msk [vmem:[#allocation2 + $0x8] sm:$0xff] %vm44, %v76
    $region21: #{tpu_custom_call.1} parent=1 // pred_fallthru
      _
    %v78 = vld [vmem:[#allocation2] sm:$0xff]
    %v79 = vld [vmem:[#allocation2 + $0x8] sm:$0xff]
    %v80 = vld [vmem:[#allocation6] sm:$0xff]
    %v81 = vld [vmem:[#allocation6 + $0x8] sm:$0xff]
    %v82 = vld [vmem:[#allocation6 + $0x10] sm:$0xff]
    %v83 = vld [vmem:[#allocation6 + $0x18] sm:$0xff]
    %v84 = vld [vmem:[#allocation6 + $0x20] sm:$0xff]
    %v85 = vld [vmem:[#allocation6 + $0x28] sm:$0xff]
    %v86 = vld [vmem:[#allocation6 + $0x30] sm:$0xff]
    %v87 = vld [vmem:[#allocation6 + $0x38] sm:$0xff]
    %v88 = vld [vmem:[#allocation6 + $0x40] sm:$0xff]
    %v89 = vld [vmem:[#allocation6 + $0x48] sm:$0xff]
    %v90 = vld [vmem:[#allocation6 + $0x50] sm:$0xff]
    %v91 = vld [vmem:[#allocation6 + $0x58] sm:$0xff]
    %v92 = vld [vmem:[#allocation6 + $0x60] sm:$0xff]
    %v93 = vld [vmem:[#allocation6 + $0x68] sm:$0xff]
    %v94 = vld [vmem:[#allocation6 + $0x70] sm:$0xff]
    %v95 = vld [vmem:[#allocation6 + $0x78] sm:$0xff]
    %v96 = vld [vmem:[#allocation6 + $0x80] sm:$0xff]
    %v97 = vld [vmem:[#allocation6 + $0x88] sm:$0xff]
    %v98 = vld [vmem:[#allocation6 + $0x90] sm:$0xff]
    %v99 = vld [vmem:[#allocation6 + $0x98] sm:$0xff]
    %vm100 = vcmask 261120
    %v102 = vsel %vm100, %v79, 0
    %104 = vmatprep.subr.mxu0 0.0
    %105 = vmatpush1.msra.mxu0 %v80
    %106 = vmatprep.subr.mxu0 0.0
    %107 = vmatpush1.msra.mxu0 %v81
    %108 = vmatprep.subr.mxu0 0.0
    %109 = vmatpush1.msra.mxu0 %v82
    %110 = vmatprep.subr.mxu0 0.0
    %111 = vmatpush1.msra.mxu0 %v83
    %112 = vmatprep.subr.mxu0 0.0
    %113 = vmatpush1.msra.mxu0 %v84
    %114 = vmatprep.subr.mxu0 0.0
    %115 = vmatpush1.msra.mxu0 %v85
    %116 = vmatprep.subr.mxu0 0.0
    %117 = vmatpush1.msra.mxu0 %v86
    %118 = vmatprep.subr.mxu0 0.0
    %119 = vmatpush1.msra.mxu0 %v87
    %120 = vmatprep.subr.mxu0 0.0
    %121 = vmatpush1.msra.mxu0 %v88
    %122 = vmatprep.subr.mxu0 0.0
    %123 = vmatpush1.msra.mxu0 %v89
    %124 = vmatprep.subr.mxu0 0.0
    %125 = vmatpush1.msra.mxu0 %v90
    %126 = vmatprep.subr.mxu0 0.0
    %127 = vmatpush1.msra.mxu0 %v91
    %128 = vmatprep.subr.mxu0 0.0
    %129 = vmatpush1.msra.mxu0 %v92
    %130 = vmatprep.subr.mxu0 0.0
    %131 = vmatpush1.msra.mxu0 %v93
    %132 = vmatprep.subr.mxu0 0.0
    %133 = vmatpush1.msra.mxu0 %v94
    %134 = vmatprep.subr.mxu0 0.0
    %135 = vmatpush1.msra.mxu0 %v95
    %136 = vmatprep.subr.mxu0 0.0
    %137 = vmatpush1.msra.mxu0 %v96
    %138 = vmatprep.subr.mxu0 0.0
    %139 = vmatpush1.msra.mxu0 %v97
    %140 = vmatprep.subr.mxu0 0.0
    %141 = vmatpush1.msra.mxu0 %v98
    %142 = vmatprep.subr.mxu0 0.0
    %143 = vmatpush1.msra.mxu0 %v99
    %144 = vmatprep.subr.mxu0 0.0
    %145 = vmatpush1.msra.mxu0 0.0
    %146 = vmatprep.subr.mxu0 0.0
    %147 = vmatpush1.msra.mxu0 0.0
    %148 = vmatprep.subr.mxu0 0.0
    %149 = vmatpush1.msra.mxu0 0.0
    %150 = vmatprep.subr.mxu0 0.0
    %151 = vmatpush1.msra.mxu0 0.0
    %152 = vmatprep.subr.mxu0 0.0
    %153 = vmatpush1.msra.mxu0 0.0
    %154 = vmatprep.subr.mxu0 0.0
    %155 = vmatpush1.msra.mxu0 0.0
    %156 = vmatprep.subr.mxu0 0.0
    %157 = vmatpush1.msra.mxu0 0.0
    %158 = vmatprep.subr.mxu0 0.0
    %159 = vmatpush1.msra.mxu0 0.0
    %160 = vmatprep.subr.mxu0 0.0
    %161 = vmatpush1.msra.mxu0 0.0
    %162 = vmatprep.subr.mxu0 0.0
    %163 = vmatpush1.msra.mxu0 0.0
    %164 = vmatprep.subr.mxu0 0.0
    %165 = vmatpush1.msra.mxu0 0.0
    %166 = vmatprep.subr.mxu0 0.0
    %167 = vmatpush1.msra.mxu0 0.0
    %168 = vmatprep.mubr.f32.mxu0 %v102
    %169 = vmatmul.mubr.f32.gmra.mrb[0].mxu0 %v78
    %v170 = vpop.f32.mrb[0].mxu0
    %v171 = vadd.f32 0.0, %v170
    %v172 = vpop.f32.mrb[0].mxu0
    %173 = vdwg.mxu0
    %174 = vst [vmem:[#allocation8] sm:$0xff] %v171
    // Predicated region
    $region22: #{tpu_custom_call.1} parent=1 // pred_check
      _
    $region23: #{tpu_custom_call.1} parent=1 // pred_check_branch
      %176 = sbr.rel (0) target = $region25
    $region24: #{tpu_custom_call.1} parent=1 // pred_region
      %s178 = ssub.s32 128, 128
      %179 = vsyncadd [#allocation5], %s178
      %s181 = sshll.u32 [#allocation8], 4
      %s182 = int_to_ptr.vmem [resolvable:$true] %s181
      %184 = dma.vmem_to_hbm [thread:$0]  %s182, 128, %s2, [#allocation5]
    $region25: #{tpu_custom_call.1} parent=1 // pred_fallthru
      _
    // Predicated region
    $region26: #{tpu_custom_call.1} parent=1 // pred_check
      _
    $region27: #{tpu_custom_call.1} parent=1 // pred_check_branch
      %186 = sbr.rel (0) target = $region29
    $region28: #{tpu_custom_call.1} parent=1 // pred_region
      %187 = dma.done [#allocation5], 128
    $region29: #{tpu_custom_call.1} parent=1 // pred_fallthru
      _
    %188 = vsyncpa [#allocation4], 1
    %189 = vsyncpa [#allocation7], 1
    %190 = vsyncpa [#allocation5], 1

</llo_original>
